<compile_context>
chip_gen: v7x
topology: tpu7x:2x2x1
jax: 0.10.0
libtpu: 0.0.40
codegen_flags: <defaults>
</compile_context>

<pallas_src>
import functools
import math

import jax
import jax.numpy as jnp
from jax.experimental import pallas as pl
from jax.experimental.pallas import tpu as pltpu


# ----------------------------- config ---------------------------------------
class Config:
    loss_wgt = [0.1] * 8               # -> in_dim = 8
    film_hidden_dim = [32, 32]         # two hidden Linear+ReLU layers
    hidden_dim = [16, 16]              # sum = 32
    alloc_hidden_dim = [16]            # sum = 16


def _round_up(x, m):
    return (x + m - 1) // m * m


# ----------------------------- kernel ---------------------------------------
def _cond_kernel(layer_meta, in_pad, log_lb, log_range, u_ref, params_ref, out_ref):
    """One batch tile: LogUniform transform + full FiLM MLP, one merged lane-dense store.

    layer_meta: static tuple of (w_row_off, w_rows, b_row_off, out_cols_padded) per layer.
    All parameter blocks are bf16, zero-padded, 8-row / 128-lane aligned.
    """
    # LogUniform(lb, ub).rsample == exp(Uniform(log lb, log ub)); exp runs on the EUP.
    lw = jnp.exp(log_lb + u_ref[...] * log_range)            # (tb, in_pad) f32
    out_ref[:, :in_pad] = lw                                  # lane-dense unmasked store

    x = lw                                                    # full 128-wide tile; padded
    n_layers = len(layer_meta)                                # weight rows are zero -> exact
    for l, (w_off, w_rows, b_off, n_cols) in enumerate(layer_meta):
        w = params_ref[w_off:w_off + w_rows, :n_cols]         # bf16, static aligned slice
        b = params_ref[b_off:b_off + 1, :n_cols].astype(jnp.float32)
        x = jnp.dot(x.astype(jnp.bfloat16), w,
                    preferred_element_type=jnp.float32) + b
        if l < n_layers - 1:
            x = jnp.maximum(x, 0.0)                           # ReLU on hidden layers only
    out_ref[:, in_pad:] = x                                   # lane-dense MLP output


# ----------------------------- param packing ---------------------------------
def pack_params(weights, biases, in_dim, param_dtype=jnp.bfloat16):
    """Pack all Linear params into one zero-padded slab (single resident DMA).

    Row layout per layer: [W padded to (in_pad_l, slab_w)] then [bias in 8 rows].
    Layer-0 W is padded to 128 rows so the whole sampled 128-lane tile feeds the first
    matmul without lane compaction; zero rows/cols keep results exact through ReLU.
    Returns (slab, meta) with meta[l] = (w_row_off, w_rows, b_row_off, out_cols_padded).
    """
    col_pads = [_round_up(w.shape[1], 128) for w in weights]      # per-layer out width
    in_pads = [_round_up(in_dim, 128)] + col_pads[:-1]            # per-layer in width
    slab_w = max(col_pads)
    blocks, meta, cur = [], [], 0
    for w, b, ip, cp in zip(weights, biases, in_pads, col_pads):
        wp = jnp.zeros((ip, slab_w), jnp.float32).at[: w.shape[0], : w.shape[1]].set(w)
        bp = jnp.zeros((8, slab_w), jnp.float32).at[:1, : b.shape[-1]].set(b.reshape(1, -1))
        meta.append((cur, ip, cur + ip, cp))
        blocks.extend([wp, bp])
        cur += ip + 8
    return jnp.concatenate(blocks, axis=0).astype(param_dtype), tuple(meta)


# ----------------------------- wrapper ---------------------------------------
def _gen_params():
    """Per-generation batch-tile cap / VMEM budget / grid-axis semantics."""
    try:
        kind = jax.devices()[0].device_kind.lower()
    except Exception:
        kind = ""
    if ("v7" in kind) or ("tpu7" in kind):
        # v7x: 64 MiB VMEM, 2 TensorCores -> smaller tile budget, real core parallelism.
        return 2048, 48 * 1024 * 1024, (pltpu.CORE_PARALLEL,)
    # v5e / v6e: 128 MiB VMEM, 1 TensorCore.
    return 4096, 64 * 1024 * 1024, ("parallel",)


def condition_network_forward(key, params_slab, *, n_batch, cfg, meta, in_pad, out_pad):
    in_dim = len(cfg.loss_wgt)
    s_hid = int(sum(cfg.hidden_dim))
    s_alloc = int(sum(cfg.alloc_hidden_dim))
    out_dim = 2 * (s_hid + s_alloc)

    tb_cap, vmem_limit, dims = _gen_params()
    # >=2 tiles once the batch is non-trivial so both v7x TensorCores get work.
    want = n_batch if n_batch <= 16 else -(-n_batch // 2)
    tb = min(_round_up(want, 8), tb_cap)
    n_tiles = pl.cdiv(n_batch, tb)
    b_pad = n_tiles * tb

    # TODO(synk): in-kernel pltpu.prng_* sampling has no interpret-mode lowering; the
    # Uniform(0,1) draw is produced with jax.random here and only the LogUniform
    # exp-transform is fused into the kernel.
    u01 = jax.random.uniform(key, (b_pad, in_pad), jnp.float32)

    log_lb = math.log(0.001)
    log_range = math.log(1.0) - math.log(0.001)
    kernel = functools.partial(_cond_kernel, meta, in_pad, log_lb, log_range)

    merged = pl.pallas_call(
        kernel,
        grid=(n_tiles,),
        in_specs=[
            pl.BlockSpec((tb, in_pad), lambda i: (i, 0)),            # uniform draws
            # Resident param slab (constant index_map keeps it in VMEM across steps).
            pl.BlockSpec(params_slab.shape, lambda i: (0, 0)),
        ],
        out_specs=pl.BlockSpec((tb, in_pad + out_pad), lambda i: (i, 0)),   # merged slab
        out_shape=jax.ShapeDtypeStruct((b_pad, in_pad + out_pad), jnp.float32),
        compiler_params=pltpu.CompilerParams(
            dimension_semantics=dims,
            vmem_limit_bytes=vmem_limit,
        ),
    )(u01, params_slab)

    # Lazy slices (fused under jit) pull the real columns back out of the lane-dense slab.
    loss_wgt = merged[:n_batch, :in_dim]
    x = merged[:n_batch, in_pad:in_pad + out_dim]
    est, alloc = x[:, : 2 * s_hid], x[:, 2 * s_hid:]
    return (loss_wgt, est[:, :s_hid], est[:, s_hid:],
            alloc[:, :s_alloc], alloc[:, s_alloc:])


# ----------------------------- param init ------------------------------------
def init_params(key, cfg):
    """PyTorch-style Linear init: Uniform(+-1/sqrt(fan_in)); W stored [in, out]."""
    in_dim = len(cfg.loss_wgt)
    out_dim = 2 * (int(sum(cfg.hidden_dim)) + int(sum(cfg.alloc_hidden_dim)))
    dims = [in_dim] + list(cfg.film_hidden_dim) + [out_dim]
    weights, biases = [], []
    for i in range(len(dims) - 1):
        key, kw, kb = jax.random.split(key, 3)
        bound = 1.0 / math.sqrt(dims[i])
        weights.append(jax.random.uniform(kw, (dims[i], dims[i + 1]),
                                          jnp.float32, -bound, bound))
        biases.append(jax.random.uniform(kb, (1, dims[i + 1]),
                                         jnp.float32, -bound, bound))
    return weights, biases


# ----------------------------- main -------------------------------------------
if __name__ == "__main__":
    cfg = Config()
    n_batch = 2
    in_dim = len(cfg.loss_wgt)
    s_hid = int(sum(cfg.hidden_dim))
    s_alloc = int(sum(cfg.alloc_hidden_dim))
    out_dim = 2 * (s_hid + s_alloc)
    in_pad = _round_up(in_dim, 128)

    root = jax.random.PRNGKey(0)
    k_params, k_sample = jax.random.split(root)

    weights, biases = init_params(k_params, cfg)
    params_slab, meta = pack_params(weights, biases, in_dim)
    out_pad = meta[-1][3]

    fwd = jax.jit(functools.partial(condition_network_forward, n_batch=n_batch,
                                    cfg=cfg, meta=meta, in_pad=in_pad, out_pad=out_pad))
    outs = jax.block_until_ready(fwd(k_sample, params_slab))
    loss_wgt, est_gamma, est_beta, alloc_gamma, alloc_beta = outs

    # shape sanity (mirrors the PyTorch forward contract)
    assert loss_wgt.shape == (n_batch, in_dim)
    assert est_gamma.shape == (n_batch, s_hid)
    assert est_beta.shape == (n_batch, s_hid)
    assert alloc_gamma.shape == (n_batch, s_alloc)
    assert alloc_beta.shape == (n_batch, s_alloc)

    # LogUniform(0.001, 1.0) support check
    assert jnp.all(loss_wgt >= 0.001 - 1e-6)
    assert jnp.all(loss_wgt <= 1.0 + 1e-6)

    got = jnp.concatenate([est_gamma, est_beta, alloc_gamma, alloc_beta], axis=-1)

    # tight check: replicate the kernel's bf16-weight / f32-accumulate math in pure JAX
    ref = loss_wgt
    for li, (w, b) in enumerate(zip(weights, biases)):
        wl = w.astype(jnp.bfloat16)
        bl = b.astype(jnp.bfloat16).astype(jnp.float32)
        ref = jnp.dot(ref.astype(jnp.bfloat16), wl,
                      preferred_element_type=jnp.float32) + bl
        if li < len(weights) - 1:
            ref = jnp.maximum(ref, 0.0)
    assert jnp.allclose(ref, got, atol=2e-3, rtol=2e-3)

    # loose semantic check vs the original full-f32 module math
    ref32 = loss_wgt
    for li, (w, b) in enumerate(zip(weights, biases)):
        ref32 = ref32 @ w + b
        if li < len(weights) - 1:
            ref32 = jnp.maximum(ref32, 0.0)
    assert jnp.allclose(ref32, got, atol=5e-2, rtol=5e-2)

    print("KERNEL_OK")
</pallas_src>

<mosaic_0001>
module attributes {stable_mosaic.version = 11 : i64} {
  func.func @_cond_kernel(%arg0: i32, %arg1: memref<8x128xf32, #tpu.memory_space<vmem>>, %arg2: memref<408x128xbf16, #tpu.memory_space<vmem>>, %arg3: memref<8x256xf32, #tpu.memory_space<vmem>>) attributes {dimension_semantics = [#tpu.dimension_semantics<parallel>], iteration_bounds = array<i64: 1>, scalar_prefetch = 0 : i64, scratch_operands = 0 : i64, tpu.core_type = #tpu.core_type<tc>, window_params = [{transform_indices = @transform_0, window_bounds = array<i64: 8, 128>}, {pipeline_mode = #tpu.pipeline_mode<synchronous>, transform_indices = @transform_1, window_bounds = array<i64: 408, 128>}, {transform_indices = @transform_2, window_bounds = array<i64: 8, 256>}]} {
    %c0 = arith.constant 0 : index
    %c0_0 = arith.constant 0 : index
    %0 = vector.load %arg1[%c0, %c0_0] : memref<8x128xf32, #tpu.memory_space<vmem>>, vector<8x128xf32>
    %cst = arith.constant 6.90775537 : f32
    %1 = vector.broadcast %cst : f32 to vector<8x128xf32>
    %2 = arith.mulf %0, %1 : vector<8x128xf32>
    %cst_1 = arith.constant -6.90775537 : f32
    %3 = vector.broadcast %cst_1 : f32 to vector<8x128xf32>
    %4 = arith.addf %3, %2 : vector<8x128xf32>
    %5 = math.exp %4 : vector<8x128xf32>
    %c0_2 = arith.constant 0 : index
    %c0_3 = arith.constant 0 : index
    %6 = vector.load %arg3[%c0_2, %c0_3] : memref<8x256xf32, #tpu.memory_space<vmem>>, vector<8x128xf32>
    tpu.vector_store %arg3[%c0_2, %c0_3], %5 {strides = array<i32>} : memref<8x256xf32, #tpu.memory_space<vmem>>, vector<8x128xf32>,
    %c0_4 = arith.constant 0 : index
    %c0_5 = arith.constant 0 : index
    %7 = vector.load %arg2[%c0_4, %c0_5] : memref<408x128xbf16, #tpu.memory_space<vmem>>, vector<128x128xbf16>
    %c128 = arith.constant 128 : index
    %c0_6 = arith.constant 0 : index
    %8 = vector.load %arg2[%c128, %c0_6] : memref<408x128xbf16, #tpu.memory_space<vmem>>, vector<1x128xbf16>
    %9 = arith.extf %8 : vector<1x128xbf16> to vector<1x128xf32>
    %10 = arith.truncf %5 : vector<8x128xf32> to vector<8x128xbf16>
    %cst_7 = arith.constant dense<0.000000e+00> : vector<8x128xf32>
    %11 = tpu.matmul %10, %7, %cst_7 {dimension_numbers = #tpu.dot_dimension_numbers<[1], [0], [0], [1], [0, 0, 1, 1], [], []>} : vector<8x128xbf16>, vector<128x128xbf16>, vector<8x128xf32> -> vector<8x128xf32>
    %12 = vector.broadcast %9 : vector<1x128xf32> to vector<8x128xf32>
    %13 = arith.addf %11, %12 : vector<8x128xf32>
    %cst_8 = arith.constant 0.000000e+00 : f32
    %14 = vector.broadcast %cst_8 : f32 to vector<8x128xf32>
    %15 = arith.maximumf %13, %14 : vector<8x128xf32>
    %c136 = arith.constant 136 : index
    %c0_9 = arith.constant 0 : index
    %16 = vector.load %arg2[%c136, %c0_9] : memref<408x128xbf16, #tpu.memory_space<vmem>>, vector<128x128xbf16>
    %c264 = arith.constant 264 : index
    %c0_10 = arith.constant 0 : index
    %17 = vector.load %arg2[%c264, %c0_10] : memref<408x128xbf16, #tpu.memory_space<vmem>>, vector<1x128xbf16>
    %18 = arith.extf %17 : vector<1x128xbf16> to vector<1x128xf32>
    %19 = arith.truncf %15 : vector<8x128xf32> to vector<8x128xbf16>
    %cst_11 = arith.constant dense<0.000000e+00> : vector<8x128xf32>
    %20 = tpu.matmul %19, %16, %cst_11 {dimension_numbers = #tpu.dot_dimension_numbers<[1], [0], [0], [1], [0, 0, 1, 1], [], []>} : vector<8x128xbf16>, vector<128x128xbf16>, vector<8x128xf32> -> vector<8x128xf32>
    %21 = vector.broadcast %18 : vector<1x128xf32> to vector<8x128xf32>
    %22 = arith.addf %20, %21 : vector<8x128xf32>
    %cst_12 = arith.constant 0.000000e+00 : f32
    %23 = vector.broadcast %cst_12 : f32 to vector<8x128xf32>
    %24 = arith.maximumf %22, %23 : vector<8x128xf32>
    %c272 = arith.constant 272 : index
    %c0_13 = arith.constant 0 : index
    %25 = vector.load %arg2[%c272, %c0_13] : memref<408x128xbf16, #tpu.memory_space<vmem>>, vector<128x128xbf16>
    %c400 = arith.constant 400 : index
    %c0_14 = arith.constant 0 : index
    %26 = vector.load %arg2[%c400, %c0_14] : memref<408x128xbf16, #tpu.memory_space<vmem>>, vector<1x128xbf16>
    %27 = arith.extf %26 : vector<1x128xbf16> to vector<1x128xf32>
    %28 = arith.truncf %24 : vector<8x128xf32> to vector<8x128xbf16>
    %cst_15 = arith.constant dense<0.000000e+00> : vector<8x128xf32>
    %29 = tpu.matmul %28, %25, %cst_15 {dimension_numbers = #tpu.dot_dimension_numbers<[1], [0], [0], [1], [0, 0, 1, 1], [], []>} : vector<8x128xbf16>, vector<128x128xbf16>, vector<8x128xf32> -> vector<8x128xf32>
    %30 = vector.broadcast %27 : vector<1x128xf32> to vector<8x128xf32>
    %31 = arith.addf %29, %30 : vector<8x128xf32>
    %c0_16 = arith.constant 0 : index
    %c128_17 = arith.constant 128 : index
    %32 = vector.load %arg3[%c0_16, %c128_17] : memref<8x256xf32, #tpu.memory_space<vmem>>, vector<8x128xf32>
    tpu.vector_store %arg3[%c0_16, %c128_17], %31 {strides = array<i32>} : memref<8x256xf32, #tpu.memory_space<vmem>>, vector<8x128xf32>,
    return
  }
  func.func @transform_0(%arg0: i32) -> (i32, i32) {
    %c0_i32 = arith.constant 0 : i32
    %c0_i32_0 = arith.constant 0 : i32
    return %arg0, %c0_i32 : i32, i32
  }
  func.func @transform_1(%arg0: i32) -> (i32, i32) {
    %c0_i32 = arith.constant 0 : i32
    %c0_i32_0 = arith.constant 0 : i32
    %c0_i32_1 = arith.constant 0 : i32
    return %c0_i32, %c0_i32_0 : i32, i32
  }
  func.func @transform_2(%arg0: i32) -> (i32, i32) {
    %c0_i32 = arith.constant 0 : i32
    %c0_i32_0 = arith.constant 0 : i32
    return %arg0, %c0_i32 : i32, i32
  }
}

</mosaic_0001>

<llo_original>
// kernel: condition_network_forward.1
$region0: #{condition_network_forward.1}
  #allocation0 [shape = 'u32[]', space=smem, size = 0x4, offset = 0x4, fixed_abs, tag = 'smem constant byte address 0x4 - core index']
  #allocation1 [shape = 'u32[144,128]{1,0:T(1,128)}', space=vmem, size = 0x12000, scoped, tag = 'internal scratch']
  %s0 = inlined_call_operand.hbm [shape: f32[8,128], index: 0, kind: input, shape index: {}]
  %s1 = inlined_call_operand.hbm [shape: bf16[408,128], index: 1, kind: input, shape index: {}]
  %s2 = inlined_call_operand.hbm [shape: f32[8,256], index: 2, kind: output, shape index: {}]
  %s3 = sld [smem:[#allocation0]]
  $region26: #{condition_network_forward.1} parent=0
    _
  %s5 = ssub.s32 1, %s3
  %s6 = scalar_select 0, %s5, %s3
  $region1: #{condition_network_forward.1} parent=0
    #allocation2 [shape = 'u8[4096]{0}', space=vmem, size = 0x1000, scoped, tag = 'input window, operand 0, single buffered']
    #allocation3 [shape = 's32[1]{0}', space=sflag, size = 0x4, scoped, tag = 'scoped memory for condition_network_forward.1']
    #allocation4 [shape = 's32[1]{0}', space=sflag, size = 0x4, scoped, tag = 'scoped memory for condition_network_forward.1']
    #allocation5 [shape = 'u8[104448]{0}', space=vmem, size = 0x19800, scoped, tag = 'input window, operand 1, single buffered']
    #allocation6 [shape = 's32[1]{0}', space=sflag, size = 0x4, scoped, tag = 'scoped memory for condition_network_forward.1']
    #allocation7 [shape = 'u8[8192]{0}', space=vmem, size = 0x2000, scoped, tag = 'output window, operand 0, single buffered']
    %7 = vsyncpa [#allocation3], 0
    %8 = vsyncpa [#allocation6], 0
    %9 = vsyncpa [#allocation4], 0
    // Predicated region
    $region2: #{condition_network_forward.1} parent=1 // pred_check
      _
    $region3: #{condition_network_forward.1} parent=1 // pred_check_branch
      %11 = sbr.rel (0) target = $region5
    $region4: #{condition_network_forward.1} parent=1 // pred_region
      %s13 = ssub.s32 128, 128
      %14 = vsyncadd [#allocation3], %s13
      %s16 = sshll.u32 [#allocation2], 4
      %s17 = int_to_ptr.vmem [resolvable:$true] %s16
      %19 = dma.hbm_to_vmem [thread:$0]  %s0, 128, %s17, [#allocation3]
    $region5: #{condition_network_forward.1} parent=1 // pred_fallthru
      _
    // Predicated region
    $region6: #{condition_network_forward.1} parent=1 // pred_check
      _
    $region7: #{condition_network_forward.1} parent=1 // pred_check_branch
      %21 = sbr.rel (0) target = $region9
    $region8: #{condition_network_forward.1} parent=1 // pred_region
      %s23 = ssub.s32 3264, 3264
      %24 = vsyncadd [#allocation6], %s23
      %s25 = sshll.u32 [#allocation5], 4
      %s26 = int_to_ptr.vmem [resolvable:$true] %s25
      %31 = dma.hbm_to_vmem [thread:$0]  %s1, 3264, %s26, [#allocation6], 64, 64, 4
    $region9: #{condition_network_forward.1} parent=1 // pred_fallthru
      _
    // Predicated region
    $region10: #{condition_network_forward.1} parent=1 // pred_check
      _
    $region11: #{condition_network_forward.1} parent=1 // pred_check_branch
      %33 = sbr.rel (0) target = $region13
    $region12: #{condition_network_forward.1} parent=1 // pred_region
      %34 = dma.done [#allocation3], 128
    $region13: #{condition_network_forward.1} parent=1 // pred_fallthru
      _
    // Predicated region
    $region14: #{condition_network_forward.1} parent=1 // pred_check
      _
    $region15: #{condition_network_forward.1} parent=1 // pred_check_branch
      %36 = sbr.rel (0) target = $region17
    $region16: #{condition_network_forward.1} parent=1 // pred_region
      %37 = dma.done [#allocation6], 3264
    $region17: #{condition_network_forward.1} parent=1 // pred_fallthru
      _
    %v39 = vld [vmem:[#allocation2] sm:$0xff]
    %v40 = vmul.f32 %v39, 6.9077554
    %v41 = vadd.f32 %v40, -6.9077554
    %v42 = vmul.f32 %v41, 1.442695
    %v43 = vpow.pop %v42
    %44 = vst [vmem:[#allocation7] sm:$0xff] %v43
    %v45 = vld [vmem:[#allocation5] sm:$0xf]
    %v46 = vld [vmem:[#allocation5 + $0x4] sm:$0xf]
    %v47 = vld [vmem:[#allocation5 + $0x8] sm:$0xf]
    %v48 = vld [vmem:[#allocation5 + $0xc] sm:$0xf]
    %v49 = vld [vmem:[#allocation5 + $0x10] sm:$0xf]
    %v50 = vld [vmem:[#allocation5 + $0x14] sm:$0xf]
    %v51 = vld [vmem:[#allocation5 + $0x18] sm:$0xf]
    %v52 = vld [vmem:[#allocation5 + $0x1c] sm:$0xf]
    %v53 = vld [vmem:[#allocation5 + $0x20] sm:$0xf]
    %v54 = vld [vmem:[#allocation5 + $0x24] sm:$0xf]
    %v55 = vld [vmem:[#allocation5 + $0x28] sm:$0xf]
    %v56 = vld [vmem:[#allocation5 + $0x2c] sm:$0xf]
    %v57 = vld [vmem:[#allocation5 + $0x30] sm:$0xf]
    %v58 = vld [vmem:[#allocation5 + $0x34] sm:$0xf]
    %v59 = vld [vmem:[#allocation5 + $0x38] sm:$0xf]
    %v60 = vld [vmem:[#allocation5 + $0x3c] sm:$0xf]
    %v61 = vld [vmem:[#allocation5 + $0x40] sm:$0x1]
    %v62 = vunpack.c.l.bf16 %v61
    %v63 = vpack.c.bf16 %v43, %v43
    %v64 = vlaneseq
    %v65 = vshrl.u32 %v64, 7
    %v66 = vsub.s32 0, %v65
    %v67 = vrot.slane %v62, %v66
    %v84 = vunpack.c.l.b16 %v45
    %v85 = vunpack.c.l.b16 %v46
    %v86 = vunpack.c.l.b16 %v47
    %v87 = vunpack.c.l.b16 %v48
    %v88 = vunpack.c.l.b16 %v49
    %v89 = vunpack.c.l.b16 %v50
    %v90 = vunpack.c.l.b16 %v51
    %v91 = vunpack.c.l.b16 %v52
    %v92 = vunpack.c.l.b16 %v53
    %v93 = vunpack.c.l.b16 %v54
    %v94 = vunpack.c.l.b16 %v55
    %v95 = vunpack.c.l.b16 %v56
    %v96 = vunpack.c.l.b16 %v57
    %v97 = vunpack.c.l.b16 %v58
    %v98 = vunpack.c.l.b16 %v59
    %v99 = vunpack.c.l.b16 %v60
    %v100 = vpack.c.b16 %v85, %v84
    %v101 = vpack.c.b16 %v87, %v86
    %v102 = vpack.c.b16 %v89, %v88
    %v103 = vpack.c.b16 %v91, %v90
    %v104 = vpack.c.b16 %v93, %v92
    %v105 = vpack.c.b16 %v95, %v94
    %v106 = vpack.c.b16 %v97, %v96
    %v107 = vpack.c.b16 %v99, %v98
    %116 = vmatprep.subr.bf16.mxu0 0
    %117 = vmatpush1.bf16.msra.mxu0 %v100
    %118 = vmatprep.subr.bf16.mxu0 0
    %119 = vmatpush1.bf16.msra.mxu0 %v101
    %120 = vmatprep.subr.bf16.mxu0 0
    %121 = vmatpush1.bf16.msra.mxu0 %v102
    %122 = vmatprep.subr.bf16.mxu0 0
    %123 = vmatpush1.bf16.msra.mxu0 %v103
    %124 = vmatprep.subr.bf16.mxu0 0
    %125 = vmatpush1.bf16.msra.mxu0 %v104
    %126 = vmatprep.subr.bf16.mxu0 0
    %127 = vmatpush1.bf16.msra.mxu0 %v105
    %128 = vmatprep.subr.bf16.mxu0 0
    %129 = vmatpush1.bf16.msra.mxu0 %v106
    %130 = vmatprep.subr.bf16.mxu0 0
    %131 = vmatpush1.bf16.msra.mxu0 %v107
    %132 = vmatprep.subr.bf16.mxu0 0
    %133 = vmatpush1.bf16.msra.mxu0 0
    %134 = vmatprep.subr.bf16.mxu0 0
    %135 = vmatpush1.bf16.msra.mxu0 0
    %136 = vmatprep.subr.bf16.mxu0 0
    %137 = vmatpush1.bf16.msra.mxu0 0
    %138 = vmatprep.subr.bf16.mxu0 0
    %139 = vmatpush1.bf16.msra.mxu0 0
    %140 = vmatprep.subr.bf16.mxu0 0
    %141 = vmatpush1.bf16.msra.mxu0 0
    %142 = vmatprep.subr.bf16.mxu0 0
    %143 = vmatpush1.bf16.msra.mxu0 0
    %144 = vmatprep.subr.bf16.mxu0 0
    %145 = vmatpush1.bf16.msra.mxu0 0
    %146 = vmatprep.subr.bf16.mxu0 0
    %147 = vmatpush1.bf16.msra.mxu0 0
    %148 = vmatprep.mubr.bf16.mxu0 0
    %149 = vmatmul.mubr.bf16.gmra.mrb[0].mxu0 %v63
    %v150 = vpop.f32.mrb[0].mxu0
    %v151 = vadd.f32 %v67, %v150
    %v152 = vpop.f32.mrb[0].mxu0
    %v153 = vpop.f32.mrb[0].mxu0
    %v154 = vpop.f32.mrb[0].mxu0
    %155 = vdwg.mxu0
    %v156 = vmax.f32 %v151, 0.0
    %v157 = vld [vmem:[#allocation5 + $0x44] sm:$0xf]
    %v158 = vld [vmem:[#allocation5 + $0x48] sm:$0xf]
    %v159 = vld [vmem:[#allocation5 + $0x4c] sm:$0xf]
    %v160 = vld [vmem:[#allocation5 + $0x50] sm:$0xf]
    %v161 = vld [vmem:[#allocation5 + $0x54] sm:$0xf]
    %v162 = vld [vmem:[#allocation5 + $0x58] sm:$0xf]
    %v163 = vld [vmem:[#allocation5 + $0x5c] sm:$0xf]
    %v164 = vld [vmem:[#allocation5 + $0x60] sm:$0xf]
    %v165 = vld [vmem:[#allocation5 + $0x64] sm:$0xf]
    %v166 = vld [vmem:[#allocation5 + $0x68] sm:$0xf]
    %v167 = vld [vmem:[#allocation5 + $0x6c] sm:$0xf]
    %v168 = vld [vmem:[#allocation5 + $0x70] sm:$0xf]
    %v169 = vld [vmem:[#allocation5 + $0x74] sm:$0xf]
    %v170 = vld [vmem:[#allocation5 + $0x78] sm:$0xf]
    %v171 = vld [vmem:[#allocation5 + $0x7c] sm:$0xf]
    %v172 = vld [vmem:[#allocation5 + $0x80] sm:$0xf]
    %v173 = vld [vmem:[#allocation5 + $0x84] sm:$0x1]
    %v174 = vunpack.c.l.bf16 %v173
    %v175 = vpack.c.bf16 %v156, %v156
    %v176 = vlaneseq
    %v177 = vshrl.u32 %v176, 7
    %v178 = vsub.s32 0, %v177
    %v179 = vrot.slane %v174, %v178
    %v196 = vunpack.c.l.b16 %v157
    %v197 = vunpack.c.l.b16 %v158
    %v198 = vunpack.c.l.b16 %v159
    %v199 = vunpack.c.l.b16 %v160
    %v200 = vunpack.c.l.b16 %v161
    %v201 = vunpack.c.l.b16 %v162
    %v202 = vunpack.c.l.b16 %v163
    %v203 = vunpack.c.l.b16 %v164
    %v204 = vunpack.c.l.b16 %v165
    %v205 = vunpack.c.l.b16 %v166
    %v206 = vunpack.c.l.b16 %v167
    %v207 = vunpack.c.l.b16 %v168
    %v208 = vunpack.c.l.b16 %v169
    %v209 = vunpack.c.l.b16 %v170
    %v210 = vunpack.c.l.b16 %v171
    %v211 = vunpack.c.l.b16 %v172
    %v212 = vpack.c.b16 %v197, %v196
    %v213 = vpack.c.b16 %v199, %v198
    %v214 = vpack.c.b16 %v201, %v200
    %v215 = vpack.c.b16 %v203, %v202
    %v216 = vpack.c.b16 %v205, %v204
    %v217 = vpack.c.b16 %v207, %v206
    %v218 = vpack.c.b16 %v209, %v208
    %v219 = vpack.c.b16 %v211, %v210
    %228 = vmatprep.subr.bf16.mxu0 0
    %229 = vmatpush1.bf16.msra.mxu0 %v212
    %230 = vmatprep.subr.bf16.mxu0 0
    %231 = vmatpush1.bf16.msra.mxu0 %v213
    %232 = vmatprep.subr.bf16.mxu0 0
    %233 = vmatpush1.bf16.msra.mxu0 %v214
    %234 = vmatprep.subr.bf16.mxu0 0
    %235 = vmatpush1.bf16.msra.mxu0 %v215
    %236 = vmatprep.subr.bf16.mxu0 0
    %237 = vmatpush1.bf16.msra.mxu0 %v216
    %238 = vmatprep.subr.bf16.mxu0 0
    %239 = vmatpush1.bf16.msra.mxu0 %v217
    %240 = vmatprep.subr.bf16.mxu0 0
    %241 = vmatpush1.bf16.msra.mxu0 %v218
    %242 = vmatprep.subr.bf16.mxu0 0
    %243 = vmatpush1.bf16.msra.mxu0 %v219
    %244 = vmatprep.subr.bf16.mxu0 0
    %245 = vmatpush1.bf16.msra.mxu0 0
    %246 = vmatprep.subr.bf16.mxu0 0
    %247 = vmatpush1.bf16.msra.mxu0 0
    %248 = vmatprep.subr.bf16.mxu0 0
    %249 = vmatpush1.bf16.msra.mxu0 0
    %250 = vmatprep.subr.bf16.mxu0 0
    %251 = vmatpush1.bf16.msra.mxu0 0
    %252 = vmatprep.subr.bf16.mxu0 0
    %253 = vmatpush1.bf16.msra.mxu0 0
    %254 = vmatprep.subr.bf16.mxu0 0
    %255 = vmatpush1.bf16.msra.mxu0 0
    %256 = vmatprep.subr.bf16.mxu0 0
    %257 = vmatpush1.bf16.msra.mxu0 0
    %258 = vmatprep.subr.bf16.mxu0 0
    %259 = vmatpush1.bf16.msra.mxu0 0
    %260 = vmatprep.mubr.bf16.mxu0 0
    %261 = vmatmul.mubr.bf16.gmra.mrb[0].mxu0 %v175
    %v262 = vpop.f32.mrb[0].mxu0
    %v263 = vadd.f32 %v179, %v262
    %v264 = vpop.f32.mrb[0].mxu0
    %v265 = vpop.f32.mrb[0].mxu0
    %v266 = vpop.f32.mrb[0].mxu0
    %267 = vdwg.mxu0
    %v268 = vmax.f32 %v263, 0.0
    %v269 = vld [vmem:[#allocation5 + $0x88] sm:$0xf]
    %v270 = vld [vmem:[#allocation5 + $0x8c] sm:$0xf]
    %v271 = vld [vmem:[#allocation5 + $0x90] sm:$0xf]
    %v272 = vld [vmem:[#allocation5 + $0x94] sm:$0xf]
    %v273 = vld [vmem:[#allocation5 + $0x98] sm:$0xf]
    %v274 = vld [vmem:[#allocation5 + $0x9c] sm:$0xf]
    %v275 = vld [vmem:[#allocation5 + $0xa0] sm:$0xf]
    %v276 = vld [vmem:[#allocation5 + $0xa4] sm:$0xf]
    %v277 = vld [vmem:[#allocation5 + $0xa8] sm:$0xf]
    %v278 = vld [vmem:[#allocation5 + $0xac] sm:$0xf]
    %v279 = vld [vmem:[#allocation5 + $0xb0] sm:$0xf]
    %v280 = vld [vmem:[#allocation5 + $0xb4] sm:$0xf]
    %v281 = vld [vmem:[#allocation5 + $0xb8] sm:$0xf]
    %v282 = vld [vmem:[#allocation5 + $0xbc] sm:$0xf]
    %v283 = vld [vmem:[#allocation5 + $0xc0] sm:$0xf]
    %v284 = vld [vmem:[#allocation5 + $0xc4] sm:$0xf]
    %v285 = vld [vmem:[#allocation5 + $0xc8] sm:$0x1]
    %v286 = vunpack.c.l.bf16 %v285
    %v287 = vpack.c.bf16 %v268, %v268
    %v288 = vlaneseq
    %v289 = vshrl.u32 %v288, 7
    %v290 = vsub.s32 0, %v289
    %v291 = vrot.slane %v286, %v290
    %v308 = vunpack.c.l.b16 %v269
    %v309 = vunpack.c.l.b16 %v270
    %v310 = vunpack.c.l.b16 %v271
    %v311 = vunpack.c.l.b16 %v272
    %v312 = vunpack.c.l.b16 %v273
    %v313 = vunpack.c.l.b16 %v274
    %v314 = vunpack.c.l.b16 %v275
    %v315 = vunpack.c.l.b16 %v276
    %v316 = vunpack.c.l.b16 %v277
    %v317 = vunpack.c.l.b16 %v278
    %v318 = vunpack.c.l.b16 %v279
    %v319 = vunpack.c.l.b16 %v280
    %v320 = vunpack.c.l.b16 %v281
    %v321 = vunpack.c.l.b16 %v282
    %v322 = vunpack.c.l.b16 %v283
    %v323 = vunpack.c.l.b16 %v284
    %v324 = vpack.c.b16 %v309, %v308
    %v325 = vpack.c.b16 %v311, %v310
    %v326 = vpack.c.b16 %v313, %v312
    %v327 = vpack.c.b16 %v315, %v314
    %v328 = vpack.c.b16 %v317, %v316
    %v329 = vpack.c.b16 %v319, %v318
    %v330 = vpack.c.b16 %v321, %v320
    %v331 = vpack.c.b16 %v323, %v322
    %340 = vmatprep.subr.bf16.mxu0 0
    %341 = vmatpush1.bf16.msra.mxu0 %v324
    %342 = vmatprep.subr.bf16.mxu0 0
    %343 = vmatpush1.bf16.msra.mxu0 %v325
    %344 = vmatprep.subr.bf16.mxu0 0
    %345 = vmatpush1.bf16.msra.mxu0 %v326
    %346 = vmatprep.subr.bf16.mxu0 0
    %347 = vmatpush1.bf16.msra.mxu0 %v327
    %348 = vmatprep.subr.bf16.mxu0 0
    %349 = vmatpush1.bf16.msra.mxu0 %v328
    %350 = vmatprep.subr.bf16.mxu0 0
    %351 = vmatpush1.bf16.msra.mxu0 %v329
    %352 = vmatprep.subr.bf16.mxu0 0
    %353 = vmatpush1.bf16.msra.mxu0 %v330
    %354 = vmatprep.subr.bf16.mxu0 0
    %355 = vmatpush1.bf16.msra.mxu0 %v331
    %356 = vmatprep.subr.bf16.mxu0 0
    %357 = vmatpush1.bf16.msra.mxu0 0
    %358 = vmatprep.subr.bf16.mxu0 0
    %359 = vmatpush1.bf16.msra.mxu0 0
    %360 = vmatprep.subr.bf16.mxu0 0
    %361 = vmatpush1.bf16.msra.mxu0 0
    %362 = vmatprep.subr.bf16.mxu0 0
    %363 = vmatpush1.bf16.msra.mxu0 0
    %364 = vmatprep.subr.bf16.mxu0 0
    %365 = vmatpush1.bf16.msra.mxu0 0
    %366 = vmatprep.subr.bf16.mxu0 0
    %367 = vmatpush1.bf16.msra.mxu0 0
    %368 = vmatprep.subr.bf16.mxu0 0
    %369 = vmatpush1.bf16.msra.mxu0 0
    %370 = vmatprep.subr.bf16.mxu0 0
    %371 = vmatpush1.bf16.msra.mxu0 0
    %372 = vmatprep.mubr.bf16.mxu0 0
    %373 = vmatmul.mubr.bf16.gmra.mrb[0].mxu0 %v287
    %v374 = vpop.f32.mrb[0].mxu0
    %v375 = vadd.f32 %v291, %v374
    %v376 = vpop.f32.mrb[0].mxu0
    %v377 = vpop.f32.mrb[0].mxu0
    %v378 = vpop.f32.mrb[0].mxu0
    %379 = vdwg.mxu0
    %380 = vst [vmem:[#allocation7 + $0x8] sm:$0xff] %v375
    // Predicated region
    $region18: #{condition_network_forward.1} parent=1 // pred_check
      _
    $region19: #{condition_network_forward.1} parent=1 // pred_check_branch
      %382 = sbr.rel (0) target = $region21
    $region20: #{condition_network_forward.1} parent=1 // pred_region
      %s384 = ssub.s32 256, 256
      %385 = vsyncadd [#allocation4], %s384
      %s387 = sshll.u32 [#allocation7], 4
      %s388 = int_to_ptr.vmem [resolvable:$true] %s387
      %390 = dma.vmem_to_hbm [thread:$0]  %s388, 256, %s2, [#allocation4]
    $region21: #{condition_network_forward.1} parent=1 // pred_fallthru
      _
    // Predicated region
    $region22: #{condition_network_forward.1} parent=1 // pred_check
      _
    $region23: #{condition_network_forward.1} parent=1 // pred_check_branch
      %392 = sbr.rel (0) target = $region25
    $region24: #{condition_network_forward.1} parent=1 // pred_region
      %393 = dma.done [#allocation4], 256
    $region25: #{condition_network_forward.1} parent=1 // pred_fallthru
      _
    %394 = vsyncpa [#allocation3], 1
    %395 = vsyncpa [#allocation6], 1
    %396 = vsyncpa [#allocation4], 1

</llo_original>
